<compile_context>
chip_gen: v5e
topology: v5e:2x2
jax: 0.10.0
libtpu: 0.0.40
codegen_flags: <defaults>
</compile_context>

<pallas_src>
import jax
import jax.numpy as jnp
from jax.experimental import pallas as pl
from jax.experimental.pallas import tpu as pltpu

_SUBLANE = 8  # f32 sublane count (second-to-last dim)


def _dot_hi(a, b):
    """f32-accurate matmul (HIGHEST precision) used in prep / kernel / ref."""
    return jnp.dot(a, b,
                   precision=jax.lax.Precision.HIGHEST,
                   preferred_element_type=jnp.float32)


def affine_kernel(x_ref, w_ref, b_ref, o_ref):
    """o = x @ w_eff + b_eff — single MXU push, f32 accumulation.

    Output is stored at its exact (B, out_dim) shape: one masked store, no
    wrapper-side pad/slice needed.
    """
    acc = _dot_hi(x_ref[...], w_ref[...])
    o_ref[...] = (acc + b_ref[...]).astype(o_ref.dtype)


def prepare_params(w1, b1, w2, b2, w3, b3):
    """ONE-TIME prep: collapse the activation-free affine chain in f32.

    layer3(layer2(layer1(x))) == x @ W_eff + b_eff because there are no
    nonlinearities.  Run this once per model (not inside the jitted forward).
    If weights were traced per-call instead, the equivalent move is to pass
    all six tensors as VMEM refs and do the 3-dot chain inside the kernel.
    """
    w_eff = _dot_hi(_dot_hi(w1, w2), w3)                    # (in_dim, out_dim)
    b_eff = _dot_hi(_dot_hi(b1, w2) + b2, w3) + b3          # (1, out_dim)
    return w_eff, b_eff


def nn_forward(x, w_eff, b_eff):
    """Forward of NN(in_dim, h1, h2, out_dim) given prepped params.

    x: (B, in_dim) f32.  w_eff: (in_dim, out_dim).  b_eff: (1, out_dim).
    Exactly one pallas_call per forward; no other HLOs when B % 8 == 0.
    """
    B = x.shape[0]
    out_dim = w_eff.shape[1]

    # Python-level conditional pad: skipped entirely at trace time for B % 8 == 0.
    pad_rows = (-B) % _SUBLANE
    if pad_rows:
        x = jnp.pad(x, ((0, pad_rows), (0, 0)))

    vmem = pl.BlockSpec(memory_space=pltpu.MemorySpace.VMEM)
    out = pl.pallas_call(
        affine_kernel,
        out_shape=jax.ShapeDtypeStruct((x.shape[0], out_dim), jnp.float32),
        in_specs=[vmem, vmem, vmem],
        out_specs=vmem,
        # Single grid point: at B=8 a grid (or megacore sharding on v7x) is
        # pure per-step overhead.  Revisit with a ('parallel',) batch axis
        # once batch reaches several hundred rows.
    )(x, w_eff, b_eff)

    if pad_rows:
        out = out[:B]
    return out


def init_params(key, in_dim, h1, h2, out_dim):
    """Deterministic init mimicking nn.Linear default: U(+-1/sqrt(fan_in))."""
    ks = jax.random.split(key, 6)

    def lin(kw, kb, fan_in, fan_out):
        bound = 1.0 / jnp.sqrt(jnp.float32(fan_in))
        # Stored as [in, out] == PyTorch weight.T, so math is x @ W + b.
        w = jax.random.uniform(kw, (fan_in, fan_out), jnp.float32, -bound, bound)
        b = jax.random.uniform(kb, (1, fan_out), jnp.float32, -bound, bound)
        return w, b

    w1, b1 = lin(ks[0], ks[1], in_dim, h1)
    w2, b2 = lin(ks[2], ks[3], h1, h2)
    w3, b3 = lin(ks[4], ks[5], h2, out_dim)
    return w1, b1, w2, b2, w3, b3


if __name__ == "__main__":
    # Iris-like sizes: 4 input features, two hidden layers, 3 output classes.
    batch, in_dim, hidden1, hidden2, out_dim = 8, 4, 32, 16, 3

    key = jax.random.PRNGKey(0)
    kx, kp = jax.random.split(key)
    x = jax.random.normal(kx, (batch, in_dim), jnp.float32)
    w1, b1, w2, b2, w3, b3 = init_params(kp, in_dim, hidden1, hidden2, out_dim)

    # One-time parameter prep (outside the per-call forward).
    w_eff, b_eff = prepare_params(w1, b1, w2, b2, w3, b3)
    w_eff, b_eff = jax.block_until_ready((w_eff, b_eff))

    fwd = jax.jit(nn_forward)
    out = fwd(x, w_eff, b_eff)
    jax.block_until_ready(out)

    # Cross-check against the plain-JAX layer-by-layer reference (same
    # semantics; the affine collapse only perturbs fp32 rounding order).
    ref = _dot_hi(_dot_hi(_dot_hi(x, w1) + b1, w2) + b2, w3) + b3
    assert out.shape == (batch, out_dim)
    assert jnp.allclose(out, ref, atol=1e-4, rtol=1e-4), float(
        jnp.max(jnp.abs(out - ref))
    )

    print("KERNEL_OK")
</pallas_src>

<mosaic_0001>
module attributes {stable_mosaic.version = 11 : i64} {
  func.func @affine_kernel(%arg0: memref<8x4xf32, #tpu.memory_space<vmem>>, %arg1: memref<4x3xf32, #tpu.memory_space<vmem>>, %arg2: memref<1x3xf32, #tpu.memory_space<vmem>>, %arg3: memref<8x3xf32, #tpu.memory_space<vmem>>) attributes {dimension_semantics = [], scalar_prefetch = 0 : i64, scratch_operands = 0 : i64, tpu.core_type = #tpu.core_type<tc>} {
    %c0 = arith.constant 0 : index
    %c0_0 = arith.constant 0 : index
    %0 = vector.load %arg0[%c0, %c0_0] : memref<8x4xf32, #tpu.memory_space<vmem>>, vector<8x4xf32>
    %c0_1 = arith.constant 0 : index
    %c0_2 = arith.constant 0 : index
    %1 = vector.load %arg1[%c0_1, %c0_2] : memref<4x3xf32, #tpu.memory_space<vmem>>, vector<4x3xf32>
    %cst = arith.constant dense<0.000000e+00> : vector<8x3xf32>
    %2 = tpu.matmul %0, %1, %cst {dimension_numbers = #tpu.dot_dimension_numbers<[1], [0], [0], [1], [0, 0, 1, 1], [], []>, precision = #tpu.contract_precision<fp32>} : vector<8x4xf32>, vector<4x3xf32>, vector<8x3xf32> -> vector<8x3xf32>
    %c0_3 = arith.constant 0 : index
    %c0_4 = arith.constant 0 : index
    %3 = vector.load %arg2[%c0_3, %c0_4] : memref<1x3xf32, #tpu.memory_space<vmem>>, vector<1x3xf32>
    %4 = vector.broadcast %3 : vector<1x3xf32> to vector<8x3xf32>
    %5 = arith.addf %2, %4 : vector<8x3xf32>
    %c0_5 = arith.constant 0 : index
    %c0_6 = arith.constant 0 : index
    %6 = vector.load %arg3[%c0_5, %c0_6] : memref<8x3xf32, #tpu.memory_space<vmem>>, vector<8x3xf32>
    tpu.vector_store %arg3[%c0_5, %c0_6], %5 {strides = array<i32>} : memref<8x3xf32, #tpu.memory_space<vmem>>, vector<8x3xf32>,
    return
  }
}

</mosaic_0001>

<llo_original>
// kernel: nn_forward.1
$region0: #{nn_forward.1}
  #allocation0 [shape = 'u32[]', space=smem, size = 0x4, offset = 0x4, fixed_abs, tag = 'smem constant byte address 0x4 - core index']
  #allocation1 [shape = 'u32[72,128]{1,0:T(1,128)}', space=vmem, size = 0x9000, scoped, tag = 'internal scratch']
  %s0 = inlined_call_operand.vmem [shape: f32[8,4], index: 0, kind: input, shape index: {}]
  %s1 = inlined_call_operand.vmem [shape: f32[4,3], index: 1, kind: input, shape index: {}]
  %s2 = inlined_call_operand.vmem [shape: f32[1,3], index: 2, kind: input, shape index: {}]
  %s3 = inlined_call_operand.vmem [shape: f32[8,3], index: 3, kind: output, shape index: {}]
  %s4 = sld [smem:[#allocation0]]
  $region22: #{nn_forward.1} parent=0
    _
  %s6 = ssub.s32 1, %s4
  %s7 = scalar_select 0, %s6, %s4
  // Predicated region
  $region2: #{nn_forward.1} parent=0 // pred_check
    _
  $region3: #{nn_forward.1} parent=0 // pred_check_branch
    %9 = sbr.rel (0) target = $region5
  $region4: #{nn_forward.1} parent=0 // pred_region
    _
  $region5: #{nn_forward.1} parent=0 // pred_fallthru
    _
  // Predicated region
  $region6: #{nn_forward.1} parent=0 // pred_check
    _
  $region7: #{nn_forward.1} parent=0 // pred_check_branch
    %11 = sbr.rel (0) target = $region9
  $region8: #{nn_forward.1} parent=0 // pred_region
    _
  $region9: #{nn_forward.1} parent=0 // pred_fallthru
    _
  // Predicated region
  $region10: #{nn_forward.1} parent=0 // pred_check
    _
  $region11: #{nn_forward.1} parent=0 // pred_check_branch
    %13 = sbr.rel (0) target = $region13
  $region12: #{nn_forward.1} parent=0 // pred_region
    _
  $region13: #{nn_forward.1} parent=0 // pred_fallthru
    _
  %v14 = vld [vmem:[%s0] sm:$0xff]
  %v15 = vld [vmem:[%s1] sm:$0xf]
  %v16 = vld [vmem:[%s2] sm:$0x1]
  %v18 = vperm.slane %v16, 0
  %vm20 = vcmask 31744
  %v22 = vsel %vm20, %v14, 0
  %vm24 = vcmask 1043456
  %v26 = vsel %vm24, %v15, 0
  %28 = vmatpush.msra.mxu0 0.0
  %29 = vmatpush.msra.mxu0 0.0
  %30 = vmatpush.msra.mxu0 0.0
  %31 = vmatpush.msra.mxu0 0.0
  %32 = vmatpush.msra.mxu0 0.0
  %33 = vmatpush.msra.mxu0 0.0
  %34 = vmatpush.msra.mxu0 0.0
  %35 = vmatpush.msra.mxu0 0.0
  %36 = vmatpush.msra.mxu0 0.0
  %37 = vmatpush.msra.mxu0 0.0
  %38 = vmatpush.msra.mxu0 0.0
  %39 = vmatpush.msra.mxu0 0.0
  %40 = vmatpush.msra.mxu0 0.0
  %41 = vmatpush.msra.mxu0 0.0
  %42 = vmatpush.msra.mxu0 0.0
  %v43 = vand.u32 %v26, 4294901760
  %44 = vmatpush.msra.mxu0 %v43
  %v45 = vand.u32 %v22, 4294901760
  %v46 = vsub.f32 %v22, %v45
  %v47 = vand.u32 %v46, 4294901760
  %v48 = vsub.f32 %v46, %v47
  %v49 = vand.u32 %v48, 4294901760
  %50 = vmatmul.f32.gmra.mxu0 %v49
  %v51 = vpop.f32.mrf.mxu0
  %v52 = vadd.f32 %v18, %v51
  %53 = vdwg.mxu0
  %54 = vmatpush.msra.mxu0 0.0
  %55 = vmatpush.msra.mxu0 0.0
  %56 = vmatpush.msra.mxu0 0.0
  %57 = vmatpush.msra.mxu0 0.0
  %58 = vmatpush.msra.mxu0 0.0
  %59 = vmatpush.msra.mxu0 0.0
  %60 = vmatpush.msra.mxu0 0.0
  %61 = vmatpush.msra.mxu0 0.0
  %62 = vmatpush.msra.mxu0 0.0
  %63 = vmatpush.msra.mxu0 0.0
  %64 = vmatpush.msra.mxu0 0.0
  %65 = vmatpush.msra.mxu0 0.0
  %66 = vmatpush.msra.mxu0 0.0
  %67 = vmatpush.msra.mxu0 0.0
  %68 = vmatpush.msra.mxu0 0.0
  %v69 = vand.u32 %v26, 4294901760
  %v70 = vsub.f32 %v26, %v69
  %v71 = vand.u32 %v70, 4294901760
  %v72 = vsub.f32 %v70, %v71
  %v73 = vand.u32 %v72, 4294901760
  %74 = vmatpush.msra.mxu0 %v73
  %v75 = vand.u32 %v22, 4294901760
  %76 = vmatmul.f32.gmra.mxu0 %v75
  %v77 = vpop.f32.mrf.mxu0
  %v78 = vadd.f32 %v52, %v77
  %79 = vdwg.mxu0
  %80 = vmatpush.msra.mxu0 0.0
  %81 = vmatpush.msra.mxu0 0.0
  %82 = vmatpush.msra.mxu0 0.0
  %83 = vmatpush.msra.mxu0 0.0
  %84 = vmatpush.msra.mxu0 0.0
  %85 = vmatpush.msra.mxu0 0.0
  %86 = vmatpush.msra.mxu0 0.0
  %87 = vmatpush.msra.mxu0 0.0
  %88 = vmatpush.msra.mxu0 0.0
  %89 = vmatpush.msra.mxu0 0.0
  %90 = vmatpush.msra.mxu0 0.0
  %91 = vmatpush.msra.mxu0 0.0
  %92 = vmatpush.msra.mxu0 0.0
  %93 = vmatpush.msra.mxu0 0.0
  %94 = vmatpush.msra.mxu0 0.0
  %v95 = vand.u32 %v26, 4294901760
  %v96 = vsub.f32 %v26, %v95
  %97 = vmatpush.msra.mxu0 %v96
  %v98 = vand.u32 %v22, 4294901760
  %v99 = vsub.f32 %v22, %v98
  %100 = vmatmul.f32.gmra.mxu0 %v99
  %v101 = vpop.f32.mrf.mxu0
  %v102 = vadd.f32 %v78, %v101
  %103 = vdwg.mxu0
  %104 = vmatpush.msra.mxu0 0.0
  %105 = vmatpush.msra.mxu0 0.0
  %106 = vmatpush.msra.mxu0 0.0
  %107 = vmatpush.msra.mxu0 0.0
  %108 = vmatpush.msra.mxu0 0.0
  %109 = vmatpush.msra.mxu0 0.0
  %110 = vmatpush.msra.mxu0 0.0
  %111 = vmatpush.msra.mxu0 0.0
  %112 = vmatpush.msra.mxu0 0.0
  %113 = vmatpush.msra.mxu0 0.0
  %114 = vmatpush.msra.mxu0 0.0
  %115 = vmatpush.msra.mxu0 0.0
  %116 = vmatpush.msra.mxu0 0.0
  %117 = vmatpush.msra.mxu0 0.0
  %118 = vmatpush.msra.mxu0 0.0
  %v119 = vand.u32 %v26, 4294901760
  %120 = vmatpush.msra.mxu0 %v119
  %v121 = vand.u32 %v22, 4294901760
  %v122 = vsub.f32 %v22, %v121
  %v123 = vand.u32 %v122, 4294901760
  %124 = vmatmul.f32.gmra.mxu0 %v123
  %v125 = vpop.f32.mrf.mxu0
  %v126 = vadd.f32 %v102, %v125
  %127 = vdwg.mxu0
  %128 = vmatpush.msra.mxu0 0.0
  %129 = vmatpush.msra.mxu0 0.0
  %130 = vmatpush.msra.mxu0 0.0
  %131 = vmatpush.msra.mxu0 0.0
  %132 = vmatpush.msra.mxu0 0.0
  %133 = vmatpush.msra.mxu0 0.0
  %134 = vmatpush.msra.mxu0 0.0
  %135 = vmatpush.msra.mxu0 0.0
  %136 = vmatpush.msra.mxu0 0.0
  %137 = vmatpush.msra.mxu0 0.0
  %138 = vmatpush.msra.mxu0 0.0
  %139 = vmatpush.msra.mxu0 0.0
  %140 = vmatpush.msra.mxu0 0.0
  %141 = vmatpush.msra.mxu0 0.0
  %142 = vmatpush.msra.mxu0 0.0
  %v143 = vand.u32 %v26, 4294901760
  %v144 = vsub.f32 %v26, %v143
  %v145 = vand.u32 %v144, 4294901760
  %146 = vmatpush.msra.mxu0 %v145
  %v147 = vand.u32 %v22, 4294901760
  %148 = vmatmul.f32.gmra.mxu0 %v147
  %v149 = vpop.f32.mrf.mxu0
  %v150 = vadd.f32 %v126, %v149
  %151 = vdwg.mxu0
  %152 = vmatpush.msra.mxu0 0.0
  %153 = vmatpush.msra.mxu0 0.0
  %154 = vmatpush.msra.mxu0 0.0
  %155 = vmatpush.msra.mxu0 0.0
  %156 = vmatpush.msra.mxu0 0.0
  %157 = vmatpush.msra.mxu0 0.0
  %158 = vmatpush.msra.mxu0 0.0
  %159 = vmatpush.msra.mxu0 0.0
  %160 = vmatpush.msra.mxu0 0.0
  %161 = vmatpush.msra.mxu0 0.0
  %162 = vmatpush.msra.mxu0 0.0
  %163 = vmatpush.msra.mxu0 0.0
  %164 = vmatpush.msra.mxu0 0.0
  %165 = vmatpush.msra.mxu0 0.0
  %166 = vmatpush.msra.mxu0 0.0
  %v167 = vand.u32 %v26, 4294901760
  %168 = vmatpush.msra.mxu0 %v167
  %v169 = vand.u32 %v22, 4294901760
  %170 = vmatmul.f32.gmra.mxu0 %v169
  %v171 = vpop.f32.mrf.mxu0
  %v172 = vadd.f32 %v150, %v171
  %173 = vdwg.mxu0
  %vm174 = vcmask 23552
  %175 = vst.msk [vmem:[%s3] sm:$0xff] %vm174, %v172
  // Predicated region
  $region14: #{nn_forward.1} parent=0 // pred_check
    _
  $region15: #{nn_forward.1} parent=0 // pred_check_branch
    %177 = sbr.rel (0) target = $region17
  $region16: #{nn_forward.1} parent=0 // pred_region
    _
  $region17: #{nn_forward.1} parent=0 // pred_fallthru
    _
  // Predicated region
  $region18: #{nn_forward.1} parent=0 // pred_check
    _
  $region19: #{nn_forward.1} parent=0 // pred_check_branch
    %179 = sbr.rel (0) target = $region21
  $region20: #{nn_forward.1} parent=0 // pred_region
    _
  $region21: #{nn_forward.1} parent=0 // pred_fallthru
    _

</llo_original>
